<compile_context>
chip_gen: v6e
topology: v6e:2x2x1
jax: 0.10.0
libtpu: 0.0.40
codegen_flags: <defaults>
</compile_context>

<pallas_src>
import functools

import numpy as np

import jax
import jax.numpy as jnp
from jax.experimental import pallas as pl
from jax.experimental.pallas import tpu as pltpu


def _round_up(x, m):
    return (x + m - 1) // m * m


# ----------------------------- packed fc layout --------------------------------

def _packed_layout(M):
    """Column permutation for the block-diagonal fc weight.

    Packed layout (width 2*(13M+3), then lane-padded):
      [ pi_L (M) | pi_R (M) | pen_L (3) | pen_R (3) |
        exp(L: sx,sy,sa,sb,ss) (5M) | exp(R) (5M) |
        tanh(L: rxy,rab) (2M) | tanh(R) (2M) |
        mu(L: mx,my,ma,mb,ms) (5M) | mu(R) (5M) ]
    """
    e0 = 2 * M + 6            # start of exp group
    t0 = e0 + 10 * M          # start of tanh group
    u0 = t0 + 4 * M           # start of identity (mu) group
    width = u0 + 10 * M       # == 2 * (13M + 3)

    exp_chunks = (3, 4, 8, 9, 12)     # sigma_x, sigma_y, sigma_a, sigma_b, sigma_slope
    tanh_chunks = (5, 10)             # rho_xy, rho_ab
    mu_chunks = (1, 2, 6, 7, 11)      # mu_x, mu_y, mu_a, mu_b, mu_slope

    def chunk_start(side, c):
        if c == 0:                                    # pi (softmax)
            return side * M
        if c in exp_chunks:
            return e0 + side * 5 * M + exp_chunks.index(c) * M
        if c in tanh_chunks:
            return t0 + side * 2 * M + tanh_chunks.index(c) * M
        return u0 + side * 5 * M + mu_chunks.index(c) * M

    def pen_start(side):
        return 2 * M + side * 3

    def cols(side):
        c = np.empty(13 * M + 3, dtype=np.int32)
        for k in range(13):
            c[k * M:(k + 1) * M] = np.arange(chunk_start(side, k),
                                             chunk_start(side, k) + M)
        c[13 * M:] = np.arange(pen_start(side), pen_start(side) + 3)
        return c

    def slices(side):
        s = [(chunk_start(side, k), M) for k in range(13)]
        s.append((pen_start(side), 3))                # get_parameter() output order
        return tuple(s)

    return dict(e0=e0, t0=t0, u0=u0, width=width,
                left_cols=cols(0), right_cols=cols(1),
                slices=(slices(0), slices(1)))


# ----------------------------- in-kernel helpers -------------------------------

def _softmax(x):
    m = jnp.max(x, axis=-1, keepdims=True)
    e = jnp.exp(x - m)
    s = jnp.sum(e, axis=-1, keepdims=True)
    return e * pl.reciprocal(s, approx=True)


# --------------------------------- the kernel ----------------------------------

def _decoder_kernel(M, feat_ref, p_ref, wfeat_ref, bzg_ref, wph_ref,
                    wfc_ref, bfc_ref, params_ref, hc_ref):
    bf16 = jnp.bfloat16
    f32 = jnp.float32

    feat = feat_ref[...]                       # (tb, d) f32
    tb, d = feat.shape

    # 1) fused feature matmul: cols [0,4d) = LSTM gate contribution (bias
    #    b_ih + b_hh), cols [4d,6d) = fc_h pre-activation (bias b_fc_h).
    zg = jnp.dot(feat.astype(bf16), wfeat_ref[...],
                 preferred_element_type=f32) + bzg_ref[...]         # (tb, 6d)
    z = jnp.tanh(zg[:, 4 * d:])                # z_father  (tb, 2d)
    h0 = z[:, :d]                              # h_father
    c0 = z[:, d:]                              # c_father

    # 2) LSTMCell gates (PyTorch order i, f, g, o): one fused matmul of [P | h0]
    #    against vstack([W_ih_P, W_hh]).
    ph = jnp.concatenate([p_ref[...].astype(bf16), h0.astype(bf16)], axis=1)
    gates = zg[:, :4 * d] + jnp.dot(ph, wph_ref[...], preferred_element_type=f32)
    i_g = jax.nn.sigmoid(gates[:, 0 * d:1 * d])
    f_g = jax.nn.sigmoid(gates[:, 1 * d:2 * d])
    g_g = jnp.tanh(gates[:, 2 * d:3 * d])
    o_g = jax.nn.sigmoid(gates[:, 3 * d:4 * d])
    c1 = f_g * c0 + i_g * g_g                  # c_father_o
    h1 = o_g * jnp.tanh(c1)                    # h_father_o

    # 3) fc with the block-diagonal, column-permuted, lane-padded weight: one
    #    matmul yields the [left | right] parameter slab in transform-group order.
    y = jnp.dot(h1.astype(bf16), wfc_ref[...],
                preferred_element_type=f32) + bfc_ref[...]          # (tb, out_pad)

    # 4) get_parameter(): one dense exp pass, one dense tanh pass (lane-mask
    #    select), 4 tiny softmaxes on the leading columns, identity elsewhere.
    ncol = y.shape[1]
    e0, t0, u0 = 2 * M + 6, 12 * M + 6, 16 * M + 6
    col = jax.lax.broadcasted_iota(jnp.int32, (1, ncol), 1)
    exp_mask = (col >= e0) & (col < t0)
    tanh_mask = (col >= t0) & (col < u0)
    t = jnp.where(exp_mask, jnp.exp(y), jnp.where(tanh_mask, jnp.tanh(y), y))

    sm = jnp.concatenate(                       # pi_L | pi_R | pen_L | pen_R
        [_softmax(y[:, 0:M]), _softmax(y[:, M:2 * M]),
         _softmax(y[:, 2 * M:2 * M + 3]), _softmax(y[:, 2 * M + 3:2 * M + 6])],
        axis=1)
    params_ref[...] = jnp.concatenate([sm, t[:, e0:]], axis=1)      # (tb, out_pad)

    # 5) hidden/cell output, lane-padded to a dense store.
    hc = jnp.concatenate([h1, c1], axis=1)      # (tb, 2d)
    pad = hc_ref.shape[1] - 2 * d
    if pad:
        hc = jnp.concatenate([hc, jnp.zeros((tb, pad), f32)], axis=1)
    hc_ref[...] = hc


# ---------------------------------- wrapper -------------------------------------

def decoder_forward(feature_father, p_father, params, *, M, block_rows=1024):
    # block_rows: ~1024 works everywhere; v5e/v6e can raise to 2048-4096 (set
    # vmem_limit_bytes if the scoped default is exceeded), v7x keep <= ~2048 and
    # prefer >= 2 grid steps so both TensorCores get work.
    n, d = feature_father.shape
    hd = d // 2
    out_dim = 13 * M + 3
    layout = _packed_layout(M)
    out_pad = _round_up(layout["width"], 128)          # 2*out_dim -> lane multiple
    hc_pad = _round_up(2 * d, 128)

    bf16 = jnp.bfloat16
    f32 = jnp.float32

    # Host-side weight packing (constant-folds under jit).
    w_feat = jnp.concatenate([params["w_ih_f"], params["w_fch"]], axis=1).astype(bf16)
    b_zg = jnp.concatenate([params["b_ih"] + params["b_hh"], params["b_fch"]], axis=1)
    w_ph = jnp.concatenate([params["w_ih_p"], params["w_hh"]], axis=0).astype(bf16)

    w_fc_blk = jnp.zeros((d, out_pad), f32)
    w_fc_blk = w_fc_blk.at[:hd, layout["left_cols"]].set(params["w_fc"])
    w_fc_blk = w_fc_blk.at[hd:, layout["right_cols"]].set(params["w_fc"])
    w_fc_blk = w_fc_blk.astype(bf16)
    b_fc_blk = jnp.zeros((1, out_pad), f32)
    b_fc_blk = b_fc_blk.at[0, layout["left_cols"]].set(params["b_fc"][0])
    b_fc_blk = b_fc_blk.at[0, layout["right_cols"]].set(params["b_fc"][0])

    feat = feature_father.astype(f32)
    p = p_father.astype(f32)

    # Batch tile: multiple of 8 sublanes; no host-side padding — the trailing
    # partial block reads unspecified rows whose outputs are dropped.
    tb = min(block_rows, _round_up(max(n, 1), 8))
    grid = (pl.cdiv(n, tb),)

    in_specs = [
        pl.BlockSpec((tb, d), lambda i: (i, 0)),                 # Feature_father
        pl.BlockSpec((tb, 8), lambda i: (i, 0)),                 # P_father
        pl.BlockSpec(w_feat.shape, lambda i: (0, 0)),            # [W_ih_feat | W_fc_h]
        pl.BlockSpec(b_zg.shape, lambda i: (0, 0)),              # [b_ih+b_hh | b_fc_h]
        pl.BlockSpec(w_ph.shape, lambda i: (0, 0)),              # vstack([W_ih_P, W_hh])
        pl.BlockSpec(w_fc_blk.shape, lambda i: (0, 0)),          # block-diag permuted fc
        pl.BlockSpec(b_fc_blk.shape, lambda i: (0, 0)),
    ]
    out_shapes = (
        jax.ShapeDtypeStruct((n, out_pad), f32),                 # [left | right] params
        jax.ShapeDtypeStruct((n, hc_pad), f32),                  # [h1 | c1 | pad]
    )
    out_specs = (
        pl.BlockSpec((tb, out_pad), lambda i: (i, 0)),
        pl.BlockSpec((tb, hc_pad), lambda i: (i, 0)),
    )

    slab, hc = pl.pallas_call(
        functools.partial(_decoder_kernel, M),
        grid=grid,
        in_specs=in_specs,
        out_specs=out_specs,
        out_shape=out_shapes,
        compiler_params=pltpu.CompilerParams(
            dimension_semantics=("parallel",)),
    )(feat, p, w_feat, b_zg, w_ph, w_fc_blk, b_fc_blk)

    h1, c1 = hc[:, :d], hc[:, d:2 * d]
    h_left, h_right = h1[:, :hd], h1[:, hd:]
    c_left, c_right = c1[:, :hd], c1[:, hd:]

    def side_params(side):
        # glue: slice the permuted, already-transformed slab back into the
        # 14-tuple that get_parameter() produces (pure indexing, no compute).
        return tuple(slab[:, s:s + w] for (s, w) in layout["slices"][side])

    return (side_params(0), h_left, c_left, side_params(1), h_right, c_right)


# ------------------------------ reference (JAX) ---------------------------------

def decoder_reference(feat, p, params, *, M):
    d = feat.shape[1]
    z = jnp.tanh(jnp.dot(feat, params["w_fch"]) + params["b_fch"])
    h0, c0 = z[:, :d], z[:, d:]
    x = jnp.concatenate([p, feat], axis=1)
    w_ih = jnp.concatenate([params["w_ih_p"], params["w_ih_f"]], axis=0)
    gates = (jnp.dot(x, w_ih) + params["b_ih"]
             + jnp.dot(h0, params["w_hh"]) + params["b_hh"])
    i = jax.nn.sigmoid(gates[:, :d])
    f = jax.nn.sigmoid(gates[:, d:2 * d])
    g = jnp.tanh(gates[:, 2 * d:3 * d])
    o = jax.nn.sigmoid(gates[:, 3 * d:])
    c1 = f * c0 + i * g
    h1 = o * jnp.tanh(c1)
    hd = d // 2

    def get_parameter(y):
        chunks = [y[:, k * M:(k + 1) * M] for k in range(13)]
        pen = y[:, 13 * M:]
        pi, mu_x, mu_y, sx, sy, rxy, mu_a, mu_b, sa, sb, rab, mus, ss = chunks
        return (jax.nn.softmax(pi, axis=1), mu_x, mu_y, jnp.exp(sx), jnp.exp(sy),
                jnp.tanh(rxy), mu_a, mu_b, jnp.exp(sa), jnp.exp(sb), jnp.tanh(rab),
                mus, jnp.exp(ss), jax.nn.softmax(pen, axis=1))

    h_left, h_right = h1[:, :hd], h1[:, hd:]
    c_left, c_right = c1[:, :hd], c1[:, hd:]
    y_left = jnp.dot(h_left, params["w_fc"]) + params["b_fc"]
    y_right = jnp.dot(h_right, params["w_fc"]) + params["b_fc"]
    return (get_parameter(y_left), h_left, c_left,
            get_parameter(y_right), h_right, c_right)


# ------------------------------ parameter init ----------------------------------

def init_params(key, n_feature, M):
    d = n_feature
    out_dim = 13 * M + 3
    ks = jax.random.split(key, 8)
    s = 0.1
    w_fch = s * jax.random.normal(ks[0], (d, 2 * d), jnp.float32)        # fc_h.weight^T
    b_fch = s * jax.random.normal(ks[1], (1, 2 * d), jnp.float32)        # fc_h.bias
    w_ih = s * jax.random.normal(ks[2], (d + 8, 4 * d), jnp.float32)     # rnn.weight_ih^T (i,f,g,o)
    w_hh = s * jax.random.normal(ks[3], (d, 4 * d), jnp.float32)         # rnn.weight_hh^T
    b_ih = s * jax.random.normal(ks[4], (1, 4 * d), jnp.float32)
    b_hh = s * jax.random.normal(ks[5], (1, 4 * d), jnp.float32)
    w_fc = s * jax.random.normal(ks[6], (d // 2, out_dim), jnp.float32)  # fc.weight^T
    b_fc = s * jax.random.normal(ks[7], (1, out_dim), jnp.float32)
    return dict(w_fch=w_fch, b_fch=b_fch,
                w_ih_p=w_ih[:8], w_ih_f=w_ih[8:],
                w_hh=w_hh, b_ih=b_ih, b_hh=b_hh,
                w_fc=w_fc, b_fc=b_fc)


# ------------------------------------ main ---------------------------------------

if __name__ == "__main__":
    n_feature = 32     # small 'd'
    M = 4              # small mixture count -> fc output = 13*M + 3 = 55
    batch = 8

    key = jax.random.PRNGKey(0)
    kp, kf, kP = jax.random.split(key, 3)
    params = init_params(kp, n_feature, M)
    feature_father = jax.random.normal(kf, (batch, n_feature), jnp.float32)
    p_father = jax.random.normal(kP, (batch, 8), jnp.float32)   # code requires 8 cols

    out = decoder_forward(feature_father, p_father, params, M=M)
    out = jax.block_until_ready(out)

    ref = decoder_reference(feature_father, p_father, params, M=M)

    flat_out = jax.tree_util.tree_leaves(out)
    flat_ref = jax.tree_util.tree_leaves(ref)
    assert len(flat_out) == len(flat_ref) == 2 * 14 + 4
    # tolerance covers bf16 MXU operands (f32 accumulate) + approx reciprocal
    for a, b in zip(flat_out, flat_ref):
        assert a.shape == b.shape and a.dtype == b.dtype
        assert jnp.allclose(a, b, atol=5e-3, rtol=5e-3), float(jnp.max(jnp.abs(a - b)))

    print("KERNEL_OK")
</pallas_src>

<mosaic_0001>
module attributes {stable_mosaic.version = 11 : i64} {
  func.func @_decoder_kernel(%arg0: i32, %arg1: memref<8x32xf32, #tpu.memory_space<vmem>>, %arg2: memref<8x8xf32, #tpu.memory_space<vmem>>, %arg3: memref<32x192xbf16, #tpu.memory_space<vmem>>, %arg4: memref<1x192xf32, #tpu.memory_space<vmem>>, %arg5: memref<40x128xbf16, #tpu.memory_space<vmem>>, %arg6: memref<32x128xbf16, #tpu.memory_space<vmem>>, %arg7: memref<1x128xf32, #tpu.memory_space<vmem>>, %arg8: memref<8x128xf32, #tpu.memory_space<vmem>>, %arg9: memref<8x128xf32, #tpu.memory_space<vmem>>) attributes {dimension_semantics = [#tpu.dimension_semantics<parallel>], iteration_bounds = array<i64: 1>, scalar_prefetch = 0 : i64, scratch_operands = 0 : i64, tpu.core_type = #tpu.core_type<tc>, window_params = [{transform_indices = @transform_0, window_bounds = array<i64: 8, 32>}, {transform_indices = @transform_1, window_bounds = array<i64: 8, 8>}, {pipeline_mode = #tpu.pipeline_mode<synchronous>, transform_indices = @transform_2, window_bounds = array<i64: 32, 192>}, {pipeline_mode = #tpu.pipeline_mode<synchronous>, transform_indices = @transform_3, window_bounds = array<i64: 1, 192>}, {pipeline_mode = #tpu.pipeline_mode<synchronous>, transform_indices = @transform_4, window_bounds = array<i64: 40, 128>}, {pipeline_mode = #tpu.pipeline_mode<synchronous>, transform_indices = @transform_5, window_bounds = array<i64: 32, 128>}, {pipeline_mode = #tpu.pipeline_mode<synchronous>, transform_indices = @transform_6, window_bounds = array<i64: 1, 128>}, {transform_indices = @transform_7, window_bounds = array<i64: 8, 128>}, {transform_indices = @transform_8, window_bounds = array<i64: 8, 128>}]} {
    %c0 = arith.constant 0 : index
    %c0_0 = arith.constant 0 : index
    %0 = vector.load %arg1[%c0, %c0_0] : memref<8x32xf32, #tpu.memory_space<vmem>>, vector<8x32xf32>
    %1 = arith.truncf %0 : vector<8x32xf32> to vector<8x32xbf16>
    %c0_1 = arith.constant 0 : index
    %c0_2 = arith.constant 0 : index
    %2 = vector.load %arg3[%c0_1, %c0_2] : memref<32x192xbf16, #tpu.memory_space<vmem>>, vector<32x192xbf16>
    %cst = arith.constant dense<0.000000e+00> : vector<8x192xf32>
    %3 = tpu.matmul %1, %2, %cst {dimension_numbers = #tpu.dot_dimension_numbers<[1], [0], [0], [1], [0, 0, 1, 1], [], []>} : vector<8x32xbf16>, vector<32x192xbf16>, vector<8x192xf32> -> vector<8x192xf32>
    %c0_3 = arith.constant 0 : index
    %c0_4 = arith.constant 0 : index
    %4 = vector.load %arg4[%c0_3, %c0_4] : memref<1x192xf32, #tpu.memory_space<vmem>>, vector<1x192xf32>
    %5 = vector.broadcast %4 : vector<1x192xf32> to vector<8x192xf32>
    %6 = arith.addf %3, %5 : vector<8x192xf32>
    %7 = vector.extract_strided_slice %6 {offsets = [0, 128], sizes = [8, 64], strides = [1, 1]} : vector<8x192xf32> to vector<8x64xf32>
    %8 = math.tanh %7 : vector<8x64xf32>
    %9 = vector.extract_strided_slice %8 {offsets = [0, 0], sizes = [8, 32], strides = [1, 1]} : vector<8x64xf32> to vector<8x32xf32>
    %10 = vector.extract_strided_slice %8 {offsets = [0, 32], sizes = [8, 32], strides = [1, 1]} : vector<8x64xf32> to vector<8x32xf32>
    %c0_5 = arith.constant 0 : index
    %c0_6 = arith.constant 0 : index
    %11 = vector.load %arg2[%c0_5, %c0_6] : memref<8x8xf32, #tpu.memory_space<vmem>>, vector<8x8xf32>
    %12 = arith.truncf %11 : vector<8x8xf32> to vector<8x8xbf16>
    %13 = arith.truncf %9 : vector<8x32xf32> to vector<8x32xbf16>
    %14 = tpu.concatenate %12, %13 in 1 : vector<8x8xbf16>, vector<8x32xbf16> -> vector<8x40xbf16>
    %15 = vector.extract_strided_slice %6 {offsets = [0, 0], sizes = [8, 128], strides = [1, 1]} : vector<8x192xf32> to vector<8x128xf32>
    %c0_7 = arith.constant 0 : index
    %c0_8 = arith.constant 0 : index
    %16 = vector.load %arg5[%c0_7, %c0_8] : memref<40x128xbf16, #tpu.memory_space<vmem>>, vector<40x128xbf16>
    %cst_9 = arith.constant dense<0.000000e+00> : vector<8x128xf32>
    %17 = tpu.matmul %14, %16, %cst_9 {dimension_numbers = #tpu.dot_dimension_numbers<[1], [0], [0], [1], [0, 0, 1, 1], [], []>} : vector<8x40xbf16>, vector<40x128xbf16>, vector<8x128xf32> -> vector<8x128xf32>
    %18 = arith.addf %15, %17 : vector<8x128xf32>
    %19 = vector.extract_strided_slice %18 {offsets = [0, 0], sizes = [8, 32], strides = [1, 1]} : vector<8x128xf32> to vector<8x32xf32>
    %20 = arith.negf %19 : vector<8x32xf32>
    %21 = math.exp %20 : vector<8x32xf32>
    %cst_10 = arith.constant 1.000000e+00 : f32
    %22 = vector.broadcast %cst_10 : f32 to vector<8x32xf32>
    %23 = arith.addf %22, %21 : vector<8x32xf32>
    %24 = arith.divf %22, %23 : vector<8x32xf32>
    %25 = vector.extract_strided_slice %18 {offsets = [0, 32], sizes = [8, 32], strides = [1, 1]} : vector<8x128xf32> to vector<8x32xf32>
    %26 = arith.negf %25 : vector<8x32xf32>
    %27 = math.exp %26 : vector<8x32xf32>
    %cst_11 = arith.constant 1.000000e+00 : f32
    %28 = vector.broadcast %cst_11 : f32 to vector<8x32xf32>
    %29 = arith.addf %28, %27 : vector<8x32xf32>
    %30 = arith.divf %28, %29 : vector<8x32xf32>
    %31 = vector.extract_strided_slice %18 {offsets = [0, 64], sizes = [8, 32], strides = [1, 1]} : vector<8x128xf32> to vector<8x32xf32>
    %32 = math.tanh %31 : vector<8x32xf32>
    %33 = vector.extract_strided_slice %18 {offsets = [0, 96], sizes = [8, 32], strides = [1, 1]} : vector<8x128xf32> to vector<8x32xf32>
    %34 = arith.negf %33 : vector<8x32xf32>
    %35 = math.exp %34 : vector<8x32xf32>
    %cst_12 = arith.constant 1.000000e+00 : f32
    %36 = vector.broadcast %cst_12 : f32 to vector<8x32xf32>
    %37 = arith.addf %36, %35 : vector<8x32xf32>
    %38 = arith.divf %36, %37 : vector<8x32xf32>
    %39 = arith.mulf %30, %10 : vector<8x32xf32>
    %40 = arith.mulf %24, %32 : vector<8x32xf32>
    %41 = arith.addf %39, %40 : vector<8x32xf32>
    %42 = math.tanh %41 : vector<8x32xf32>
    %43 = arith.mulf %38, %42 : vector<8x32xf32>
    %44 = arith.truncf %43 : vector<8x32xf32> to vector<8x32xbf16>
    %c0_13 = arith.constant 0 : index
    %c0_14 = arith.constant 0 : index
    %45 = vector.load %arg6[%c0_13, %c0_14] : memref<32x128xbf16, #tpu.memory_space<vmem>>, vector<32x128xbf16>
    %cst_15 = arith.constant dense<0.000000e+00> : vector<8x128xf32>
    %46 = tpu.matmul %44, %45, %cst_15 {dimension_numbers = #tpu.dot_dimension_numbers<[1], [0], [0], [1], [0, 0, 1, 1], [], []>} : vector<8x32xbf16>, vector<32x128xbf16>, vector<8x128xf32> -> vector<8x128xf32>
    %c0_16 = arith.constant 0 : index
    %c0_17 = arith.constant 0 : index
    %47 = vector.load %arg7[%c0_16, %c0_17] : memref<1x128xf32, #tpu.memory_space<vmem>>, vector<1x128xf32>
    %48 = vector.broadcast %47 : vector<1x128xf32> to vector<8x128xf32>
    %49 = arith.addf %46, %48 : vector<8x128xf32>
    %50 = tpu.iota {dimensions = array<i32: 1>} : vector<1x128xi32>
    %c14_i32 = arith.constant 14 : i32
    %51 = vector.broadcast %c14_i32 : i32 to vector<1x128xi32>
    %52 = arith.cmpi sge, %50, %51 : vector<1x128xi32>
    %c54_i32 = arith.constant 54 : i32
    %53 = vector.broadcast %c54_i32 : i32 to vector<1x128xi32>
    %54 = arith.cmpi slt, %50, %53 : vector<1x128xi32>
    %55 = arith.andi %52, %54 : vector<1x128xi1>
    %c54_i32_18 = arith.constant 54 : i32
    %56 = vector.broadcast %c54_i32_18 : i32 to vector<1x128xi32>
    %57 = arith.cmpi sge, %50, %56 : vector<1x128xi32>
    %c70_i32 = arith.constant 70 : i32
    %58 = vector.broadcast %c70_i32 : i32 to vector<1x128xi32>
    %59 = arith.cmpi slt, %50, %58 : vector<1x128xi32>
    %60 = arith.andi %57, %59 : vector<1x128xi1>
    %61 = math.exp %49 : vector<8x128xf32>
    %62 = math.tanh %49 : vector<8x128xf32>
    %63 = vector.shape_cast %60 : vector<1x128xi1> to vector<1x128xi1>
    %64 = vector.broadcast %63 : vector<1x128xi1> to vector<8x128xi1>
    %65 = arith.select %64, %62, %49 : vector<8x128xi1>, vector<8x128xf32>
    %66 = vector.shape_cast %55 : vector<1x128xi1> to vector<1x128xi1>
    %67 = vector.broadcast %66 : vector<1x128xi1> to vector<8x128xi1>
    %68 = arith.select %67, %61, %65 : vector<8x128xi1>, vector<8x128xf32>
    %69 = vector.extract_strided_slice %49 {offsets = [0, 0], sizes = [8, 4], strides = [1, 1]} : vector<8x128xf32> to vector<8x4xf32>
    %cst_19 = arith.constant dense<0xFF800000> : vector<8xf32>
    %70 = vector.multi_reduction <maximumf>, %69, %cst_19 [1] : vector<8x4xf32> to vector<8xf32>
    %71 = vector.shape_cast %70 : vector<8xf32> to vector<8x1xf32>
    %72 = vector.broadcast %71 : vector<8x1xf32> to vector<8x4xf32>
    %73 = arith.subf %69, %72 : vector<8x4xf32>
    %74 = math.exp %73 : vector<8x4xf32>
    %cst_20 = arith.constant dense<0.000000e+00> : vector<8xf32>
    %75 = vector.multi_reduction <add>, %74, %cst_20 [1] : vector<8x4xf32> to vector<8xf32>
    %76 = vector.shape_cast %75 : vector<8xf32> to vector<8x1xf32>
    %77 = tpu.reciprocal %76 {approx = true} : vector<8x1xf32> -> vector<8x1xf32>
    %78 = vector.broadcast %77 : vector<8x1xf32> to vector<8x4xf32>
    %79 = arith.mulf %74, %78 : vector<8x4xf32>
    %80 = vector.extract_strided_slice %49 {offsets = [0, 4], sizes = [8, 4], strides = [1, 1]} : vector<8x128xf32> to vector<8x4xf32>
    %cst_21 = arith.constant dense<0xFF800000> : vector<8xf32>
    %81 = vector.multi_reduction <maximumf>, %80, %cst_21 [1] : vector<8x4xf32> to vector<8xf32>
    %82 = vector.shape_cast %81 : vector<8xf32> to vector<8x1xf32>
    %83 = vector.broadcast %82 : vector<8x1xf32> to vector<8x4xf32>
    %84 = arith.subf %80, %83 : vector<8x4xf32>
    %85 = math.exp %84 : vector<8x4xf32>
    %cst_22 = arith.constant dense<0.000000e+00> : vector<8xf32>
    %86 = vector.multi_reduction <add>, %85, %cst_22 [1] : vector<8x4xf32> to vector<8xf32>
    %87 = vector.shape_cast %86 : vector<8xf32> to vector<8x1xf32>
    %88 = tpu.reciprocal %87 {approx = true} : vector<8x1xf32> -> vector<8x1xf32>
    %89 = vector.broadcast %88 : vector<8x1xf32> to vector<8x4xf32>
    %90 = arith.mulf %85, %89 : vector<8x4xf32>
    %91 = vector.extract_strided_slice %49 {offsets = [0, 8], sizes = [8, 3], strides = [1, 1]} : vector<8x128xf32> to vector<8x3xf32>
    %cst_23 = arith.constant dense<0xFF800000> : vector<8xf32>
    %92 = vector.multi_reduction <maximumf>, %91, %cst_23 [1] : vector<8x3xf32> to vector<8xf32>
    %93 = vector.shape_cast %92 : vector<8xf32> to vector<8x1xf32>
    %94 = vector.broadcast %93 : vector<8x1xf32> to vector<8x3xf32>
    %95 = arith.subf %91, %94 : vector<8x3xf32>
    %96 = math.exp %95 : vector<8x3xf32>
    %cst_24 = arith.constant dense<0.000000e+00> : vector<8xf32>
    %97 = vector.multi_reduction <add>, %96, %cst_24 [1] : vector<8x3xf32> to vector<8xf32>
    %98 = vector.shape_cast %97 : vector<8xf32> to vector<8x1xf32>
    %99 = tpu.reciprocal %98 {approx = true} : vector<8x1xf32> -> vector<8x1xf32>
    %100 = vector.broadcast %99 : vector<8x1xf32> to vector<8x3xf32>
    %101 = arith.mulf %96, %100 : vector<8x3xf32>
    %102 = vector.extract_strided_slice %49 {offsets = [0, 11], sizes = [8, 3], strides = [1, 1]} : vector<8x128xf32> to vector<8x3xf32>
    %cst_25 = arith.constant dense<0xFF800000> : vector<8xf32>
    %103 = vector.multi_reduction <maximumf>, %102, %cst_25 [1] : vector<8x3xf32> to vector<8xf32>
    %104 = vector.shape_cast %103 : vector<8xf32> to vector<8x1xf32>
    %105 = vector.broadcast %104 : vector<8x1xf32> to vector<8x3xf32>
    %106 = arith.subf %102, %105 : vector<8x3xf32>
    %107 = math.exp %106 : vector<8x3xf32>
    %cst_26 = arith.constant dense<0.000000e+00> : vector<8xf32>
    %108 = vector.multi_reduction <add>, %107, %cst_26 [1] : vector<8x3xf32> to vector<8xf32>
    %109 = vector.shape_cast %108 : vector<8xf32> to vector<8x1xf32>
    %110 = tpu.reciprocal %109 {approx = true} : vector<8x1xf32> -> vector<8x1xf32>
    %111 = vector.broadcast %110 : vector<8x1xf32> to vector<8x3xf32>
    %112 = arith.mulf %107, %111 : vector<8x3xf32>
    %113 = tpu.concatenate %79, %90, %101, %112 in 1 : vector<8x4xf32>, vector<8x4xf32>, vector<8x3xf32>, vector<8x3xf32> -> vector<8x14xf32>
    %114 = vector.extract_strided_slice %68 {offsets = [0, 14], sizes = [8, 114], strides = [1, 1]} : vector<8x128xf32> to vector<8x114xf32>
    %115 = tpu.concatenate %113, %114 in 1 : vector<8x14xf32>, vector<8x114xf32> -> vector<8x128xf32>
    %c0_27 = arith.constant 0 : index
    %c0_28 = arith.constant 0 : index
    %116 = vector.load %arg8[%c0_27, %c0_28] : memref<8x128xf32, #tpu.memory_space<vmem>>, vector<8x128xf32>
    tpu.vector_store %arg8[%c0_27, %c0_28], %115 {strides = array<i32>} : memref<8x128xf32, #tpu.memory_space<vmem>>, vector<8x128xf32>,
    %117 = tpu.concatenate %43, %41 in 1 : vector<8x32xf32>, vector<8x32xf32> -> vector<8x64xf32>
    %cst_29 = arith.constant 0.000000e+00 : f32
    %118 = vector.broadcast %cst_29 : f32 to vector<8x64xf32>
    %119 = tpu.concatenate %117, %118 in 1 : vector<8x64xf32>, vector<8x64xf32> -> vector<8x128xf32>
    %c0_30 = arith.constant 0 : index
    %c0_31 = arith.constant 0 : index
    %120 = vector.load %arg9[%c0_30, %c0_31] : memref<8x128xf32, #tpu.memory_space<vmem>>, vector<8x128xf32>
    tpu.vector_store %arg9[%c0_30, %c0_31], %119 {strides = array<i32>} : memref<8x128xf32, #tpu.memory_space<vmem>>, vector<8x128xf32>,
    return
  }
  func.func @transform_0(%arg0: i32) -> (i32, i32) {
    %c0_i32 = arith.constant 0 : i32
    %c0_i32_0 = arith.constant 0 : i32
    return %arg0, %c0_i32 : i32, i32
  }
  func.func @transform_1(%arg0: i32) -> (i32, i32) {
    %c0_i32 = arith.constant 0 : i32
    %c0_i32_0 = arith.constant 0 : i32
    return %arg0, %c0_i32 : i32, i32
  }
  func.func @transform_2(%arg0: i32) -> (i32, i32) {
    %c0_i32 = arith.constant 0 : i32
    %c0_i32_0 = arith.constant 0 : i32
    %c0_i32_1 = arith.constant 0 : i32
    return %c0_i32, %c0_i32_0 : i32, i32
  }
  func.func @transform_3(%arg0: i32) -> (i32, i32) {
    %c0_i32 = arith.constant 0 : i32
    %c0_i32_0 = arith.constant 0 : i32
    %c0_i32_1 = arith.constant 0 : i32
    return %c0_i32, %c0_i32_0 : i32, i32
  }
  func.func @transform_4(%arg0: i32) -> (i32, i32) {
    %c0_i32 = arith.constant 0 : i32
    %c0_i32_0 = arith.constant 0 : i32
    %c0_i32_1 = arith.constant 0 : i32
    return %c0_i32, %c0_i32_0 : i32, i32
  }
  func.func @transform_5(%arg0: i32) -> (i32, i32) {
    %c0_i32 = arith.constant 0 : i32
    %c0_i32_0 = arith.constant 0 : i32
    %c0_i32_1 = arith.constant 0 : i32
    return %c0_i32, %c0_i32_0 : i32, i32
  }
  func.func @transform_6(%arg0: i32) -> (i32, i32) {
    %c0_i32 = arith.constant 0 : i32
    %c0_i32_0 = arith.constant 0 : i32
    %c0_i32_1 = arith.constant 0 : i32
    return %c0_i32, %c0_i32_0 : i32, i32
  }
  func.func @transform_7(%arg0: i32) -> (i32, i32) {
    %c0_i32 = arith.constant 0 : i32
    %c0_i32_0 = arith.constant 0 : i32
    return %arg0, %c0_i32 : i32, i32
  }
  func.func @transform_8(%arg0: i32) -> (i32, i32) {
    %c0_i32 = arith.constant 0 : i32
    %c0_i32_0 = arith.constant 0 : i32
    return %arg0, %c0_i32 : i32, i32
  }
}

</mosaic_0001>

<llo_original>
// kernel: tpu_custom_call.1
$region0: #{tpu_custom_call.1}
  #allocation0 [shape = 'u32[]', space=smem, size = 0x4, offset = 0x4, fixed_abs, tag = 'smem constant byte address 0x4 - core index']
  #allocation1 [shape = 'u32[144,128]{1,0:T(1,128)}', space=vmem, size = 0x12000, scoped, tag = 'internal scratch']
  %s0 = inlined_call_operand.hbm [shape: f32[8,32], index: 0, kind: input, shape index: {}]
  %s1 = inlined_call_operand.hbm [shape: f32[8,8], index: 1, kind: input, shape index: {}]
  %s2 = inlined_call_operand.hbm [shape: bf16[32,192], index: 2, kind: input, shape index: {}]
  %s3 = inlined_call_operand.vmem [shape: f32[1,192], index: 3, kind: input, shape index: {}]
  %s4 = inlined_call_operand.hbm [shape: bf16[40,128], index: 4, kind: input, shape index: {}]
  %s5 = inlined_call_operand.hbm [shape: bf16[32,128], index: 5, kind: input, shape index: {}]
  %s6 = inlined_call_operand.vmem [shape: f32[1,128], index: 6, kind: input, shape index: {}]
  %s7 = inlined_call_operand.hbm [shape: f32[8,128], index: 7, kind: output, shape index: {0}]
  %s8 = inlined_call_operand.hbm [shape: f32[8,128], index: 8, kind: output, shape index: {1}]
  %9 = xla_tuple %s7, %s8
  %s10 = sld [smem:[#allocation0]]
  $region66: #{tpu_custom_call.1} parent=0
    _
  %s12 = ssub.s32 1, %s10
  %s13 = scalar_select 0, %s12, %s10
  $region1: #{tpu_custom_call.1} parent=0
    #allocation2 [shape = 'u8[4096]{0}', space=vmem, size = 0x1000, scoped, tag = 'input window, operand 0, single buffered']
    #allocation3 [shape = 's32[1]{0}', space=sflag, size = 0x4, scoped, tag = 'scoped memory for tpu_custom_call.1']
    #allocation4 [shape = 's32[1]{0}', space=sflag, size = 0x4, scoped, tag = 'scoped memory for tpu_custom_call.1']
    #allocation5 [shape = 'u8[4096]{0}', space=vmem, size = 0x1000, scoped, tag = 'input window, operand 1, single buffered']
    #allocation6 [shape = 's32[1]{0}', space=sflag, size = 0x4, scoped, tag = 'scoped memory for tpu_custom_call.1']
    #allocation7 [shape = 'u8[16384]{0}', space=vmem, size = 0x4000, scoped, tag = 'input window, operand 2, single buffered']
    #allocation8 [shape = 'u8[10240]{0}', space=vmem, size = 0x2800, scoped, tag = 'input window, operand 4, single buffered']
    #allocation9 [shape = 's32[1]{0}', space=sflag, size = 0x4, scoped, tag = 'scoped memory for tpu_custom_call.1']
    #allocation10 [shape = 'u8[8192]{0}', space=vmem, size = 0x2000, scoped, tag = 'input window, operand 5, single buffered']
    #allocation11 [shape = 'u8[4096]{0}', space=vmem, size = 0x1000, scoped, tag = 'output window, operand 0, single buffered']
    #allocation12 [shape = 'u8[4096]{0}', space=vmem, size = 0x1000, scoped, tag = 'output window, operand 1, single buffered']
    #allocation13 [shape = 's32[1]{0}', space=sflag, size = 0x4, scoped, tag = 'scoped memory for tpu_custom_call.1']
    %14 = vsyncpa [#allocation3], 0
    %15 = vsyncpa [#allocation6], 0
    %16 = vsyncpa [#allocation9], 0
    %17 = vsyncpa [#allocation4], 0
    %18 = vsyncpa [#allocation13], 0
    // Predicated region
    $region2: #{tpu_custom_call.1} parent=1 // pred_check
      _
    $region3: #{tpu_custom_call.1} parent=1 // pred_check_branch
      %20 = sbr.rel (0) target = $region5
    $region4: #{tpu_custom_call.1} parent=1 // pred_region
      %s22 = ssub.s32 128, 128
      %23 = vsyncadd [#allocation3], %s22
      %s25 = sshll.u32 [#allocation2], 4
      %s26 = int_to_ptr.vmem [resolvable:$true] %s25
      %28 = dma.hbm_to_vmem [thread:$0]  %s0, 128, %s26, [#allocation3]
    $region5: #{tpu_custom_call.1} parent=1 // pred_fallthru
      _
    // Predicated region
    $region6: #{tpu_custom_call.1} parent=1 // pred_check
      _
    $region7: #{tpu_custom_call.1} parent=1 // pred_check_branch
      %30 = sbr.rel (0) target = $region9
    $region8: #{tpu_custom_call.1} parent=1 // pred_region
      %s32 = ssub.s32 128, 128
      %33 = vsyncadd [#allocation6], %s32
      %s35 = sshll.u32 [#allocation5], 4
      %s36 = int_to_ptr.vmem [resolvable:$true] %s35
      %38 = dma.hbm_to_vmem [thread:$0]  %s1, 128, %s36, [#allocation6]
    $region9: #{tpu_custom_call.1} parent=1 // pred_fallthru
      _
    // Predicated region
    $region10: #{tpu_custom_call.1} parent=1 // pred_check
      _
    $region11: #{tpu_custom_call.1} parent=1 // pred_check_branch
      %40 = sbr.rel (0) target = $region13
    $region12: #{tpu_custom_call.1} parent=1 // pred_region
      %s42 = ssub.s32 512, 512
      %43 = vsyncadd [#allocation6], %s42
      %s44 = sshll.u32 [#allocation7], 4
      %s45 = int_to_ptr.vmem [resolvable:$true] %s44
      %50 = dma.hbm_to_vmem [thread:$0]  %s2, 512, %s45, [#allocation6], 128, 128, 8
    $region13: #{tpu_custom_call.1} parent=1 // pred_fallthru
      _
    // Predicated region
    $region14: #{tpu_custom_call.1} parent=1 // pred_check
      _
    $region15: #{tpu_custom_call.1} parent=1 // pred_check_branch
      %52 = sbr.rel (0) target = $region17
    $region16: #{tpu_custom_call.1} parent=1 // pred_region
      _
    $region17: #{tpu_custom_call.1} parent=1 // pred_fallthru
      _
    // Predicated region
    $region18: #{tpu_custom_call.1} parent=1 // pred_check
      _
    $region19: #{tpu_custom_call.1} parent=1 // pred_check_branch
      %54 = sbr.rel (0) target = $region21
    $region20: #{tpu_custom_call.1} parent=1 // pred_region
      %s56 = ssub.s32 320, 320
      %57 = vsyncadd [#allocation9], %s56
      %s58 = sshll.u32 [#allocation8], 4
      %s59 = int_to_ptr.vmem [resolvable:$true] %s58
      %64 = dma.hbm_to_vmem [thread:$0]  %s4, 320, %s59, [#allocation9], 64, 64, 4
    $region21: #{tpu_custom_call.1} parent=1 // pred_fallthru
      _
    // Predicated region
    $region22: #{tpu_custom_call.1} parent=1 // pred_check
      _
    $region23: #{tpu_custom_call.1} parent=1 // pred_check_branch
      %66 = sbr.rel (0) target = $region25
    $region24: #{tpu_custom_call.1} parent=1 // pred_region
      %s68 = ssub.s32 256, 256
      %69 = vsyncadd [#allocation9], %s68
      %s70 = sshll.u32 [#allocation10], 4
      %s71 = int_to_ptr.vmem [resolvable:$true] %s70
      %76 = dma.hbm_to_vmem [thread:$0]  %s5, 256, %s71, [#allocation9], 64, 64, 4
    $region25: #{tpu_custom_call.1} parent=1 // pred_fallthru
      _
    // Predicated region
    $region26: #{tpu_custom_call.1} parent=1 // pred_check
      _
    $region27: #{tpu_custom_call.1} parent=1 // pred_check_branch
      %78 = sbr.rel (0) target = $region29
    $region28: #{tpu_custom_call.1} parent=1 // pred_region
      _
    $region29: #{tpu_custom_call.1} parent=1 // pred_fallthru
      _
    // Predicated region
    $region30: #{tpu_custom_call.1} parent=1 // pred_check
      _
    $region31: #{tpu_custom_call.1} parent=1 // pred_check_branch
      %80 = sbr.rel (0) target = $region33
    $region32: #{tpu_custom_call.1} parent=1 // pred_region
      %81 = dma.done [#allocation3], 128
    $region33: #{tpu_custom_call.1} parent=1 // pred_fallthru
      _
    // Predicated region
    $region34: #{tpu_custom_call.1} parent=1 // pred_check
      _
    $region35: #{tpu_custom_call.1} parent=1 // pred_check_branch
      %83 = sbr.rel (0) target = $region37
    $region36: #{tpu_custom_call.1} parent=1 // pred_region
      %84 = dma.done [#allocation6], 128
    $region37: #{tpu_custom_call.1} parent=1 // pred_fallthru
      _
    // Predicated region
    $region38: #{tpu_custom_call.1} parent=1 // pred_check
      _
    $region39: #{tpu_custom_call.1} parent=1 // pred_check_branch
      %86 = sbr.rel (0) target = $region41
    $region40: #{tpu_custom_call.1} parent=1 // pred_region
      %87 = dma.done [#allocation6], 512
    $region41: #{tpu_custom_call.1} parent=1 // pred_fallthru
      _
    // Predicated region
    $region42: #{tpu_custom_call.1} parent=1 // pred_check
      _
    $region43: #{tpu_custom_call.1} parent=1 // pred_check_branch
      %89 = sbr.rel (0) target = $region45
    $region44: #{tpu_custom_call.1} parent=1 // pred_region
      %90 = dma.done [#allocation9], 320
    $region45: #{tpu_custom_call.1} parent=1 // pred_fallthru
      _
    // Predicated region
    $region46: #{tpu_custom_call.1} parent=1 // pred_check
      _
    $region47: #{tpu_custom_call.1} parent=1 // pred_check_branch
      %92 = sbr.rel (0) target = $region49
    $region48: #{tpu_custom_call.1} parent=1 // pred_region
      %93 = dma.done [#allocation9], 256
    $region49: #{tpu_custom_call.1} parent=1 // pred_fallthru
      _
    %v95 = vld [vmem:[#allocation2] sm:$0xff]
    %v96 = vpack.c.bf16 %v95, %v95
    %v97 = vld [vmem:[#allocation7] sm:$0xff]
    %v98 = vld [vmem:[#allocation7 + $0x8] sm:$0xff]
    %v99 = vld [vmem:[#allocation7 + $0x10] sm:$0xff]
    %v100 = vld [vmem:[#allocation7 + $0x18] sm:$0xff]
    %v101 = vld [vmem:[%s3] sm:$0x3]
    %v103 = vlaneseq
    %v104 = vshrl.u32 %v103, 7
    %v105 = vsub.s32 0, %v104
    %v106 = vrot.slane %v101, %v105
    %v107 = vlaneseq
    %v108 = vshrl.u32 %v107, 7
    %v109 = vsub.s32 1, %v108
    %v110 = vrot.slane %v101, %v109
    %v117 = vunpack.c.l.b16 %v97
    %v118 = vunpack.c.h.b16 %v97
    %v119 = vunpack.c.l.b16 %v98
    %v120 = vunpack.c.h.b16 %v98
    %v121 = vunpack.c.l.b16 %v99
    %v122 = vunpack.c.h.b16 %v99
    %v123 = vunpack.c.l.b16 %v100
    %v124 = vunpack.c.h.b16 %v100
    %v125 = vpack.c.b16 %v119, %v117
    %v126 = vpack.c.b16 %v120, %v118
    %v127 = vpack.c.b16 %v123, %v121
    %v128 = vpack.c.b16 %v124, %v122
    %vm133 = vcmask 261120
    %v135 = vsel %vm133, %v96, 0
    %137 = vmatprep.subr.bf16.mxu0 0
    %138 = vmatpush1.bf16.msra.mxu0 0
    %139 = vmatprep.subr.bf16.mxu0 0
    %140 = vmatpush1.bf16.msra.mxu0 0
    %141 = vmatprep.subr.bf16.mxu0 0
    %142 = vmatpush1.bf16.msra.mxu0 0
    %143 = vmatprep.subr.bf16.mxu0 0
    %144 = vmatpush1.bf16.msra.mxu0 0
    %145 = vmatprep.subr.bf16.mxu0 0
    %146 = vmatpush1.bf16.msra.mxu0 0
    %147 = vmatprep.subr.bf16.mxu0 0
    %148 = vmatpush1.bf16.msra.mxu0 0
    %149 = vmatprep.subr.bf16.mxu0 %v128
    %150 = vmatpush1.bf16.msra.mxu0 %v127
    %151 = vmatprep.subr.bf16.mxu0 %v126
    %152 = vmatpush1.bf16.msra.mxu0 %v125
    %153 = vmatprep.subr.bf16.mxu0 0
    %154 = vmatpush2.bf16.msra.mxu0 0
    %155 = vmatprep.subr.bf16.mxu0 0
    %156 = vmatpush2.bf16.msra.mxu0 0
    %157 = vmatprep.subr.bf16.mxu0 0
    %158 = vmatpush2.bf16.msra.mxu0 0
    %159 = vmatprep.subr.bf16.mxu0 0
    %160 = vmatpush2.bf16.msra.mxu0 0
    %161 = vmatprep.subr.bf16.mxu0 0
    %162 = vmatpush2.bf16.msra.mxu0 0
    %163 = vmatprep.subr.bf16.mxu0 0
    %164 = vmatpush2.bf16.msra.mxu0 0
    %165 = vmatprep.subr.bf16.mxu0 0
    %166 = vmatpush2.bf16.msra.mxu0 0
    %167 = vmatprep.subr.bf16.mxu0 0
    %168 = vmatpush2.bf16.msra.mxu0 0
    %169 = vmatprep.mubr.bf16.mxu0 0
    %170 = vmatmul.mubr.bf16.gmra.mxu0 %v135
    %v171 = vpop.f32.mrf.mxu0
    %v172 = vadd.f32 %v106, %v171
    %v173 = vpop.f32.mrf.mxu0
    %v174 = vadd.f32 %v110, %v173
    %v175 = vpop.f32.mrf.mxu0
    %v176 = vpop.f32.mrf.mxu0
    %177 = vdwg.mxu0
    %v178 = vtanh.pop %v174
    %v179 = vld [vmem:[#allocation5] sm:$0xff]
    %v180 = vpack.c.bf16 %v179, %v179
    %v181 = vpack.c.bf16 %v178, %v178
    %183 = vrot.lane.b32.xlu0 %v181, 8
    %v184 = vpop.permute.xlu0 %183
    %vm185 = vcmask 64512
    %v188 = vsel %vm185, %v180, %v184
    %v189 = vld [vmem:[#allocation8] sm:$0xf]
    %v190 = vld [vmem:[#allocation8 + $0x4] sm:$0xf]
    %v191 = vld [vmem:[#allocation8 + $0x8] sm:$0xf]
    %v192 = vld [vmem:[#allocation8 + $0xc] sm:$0xf]
    %v193 = vld [vmem:[#allocation8 + $0x10] sm:$0xf]
    %v199 = vunpack.c.l.b16 %v189
    %v200 = vunpack.c.l.b16 %v190
    %v201 = vunpack.c.l.b16 %v191
    %v202 = vunpack.c.l.b16 %v192
    %v203 = vunpack.c.l.b16 %v193
    %v204 = vpack.c.b16 %v200, %v199
    %v205 = vpack.c.b16 %v202, %v201
    %v206 = vpack.c.b16 %v203, %v203
    %vm209 = vcmask 326656
    %v210 = vsel %vm209, %v188, 0
    %vm212 = vcmask 1043456
    %v214 = vsel %vm212, %v206, 0
    %216 = vmatprep.subr.bf16.mxu0 0
    %217 = vmatpush1.bf16.msra.mxu0 0
    %218 = vmatprep.subr.bf16.mxu0 0
    %219 = vmatpush1.bf16.msra.mxu0 0
    %220 = vmatprep.subr.bf16.mxu0 0
    %221 = vmatpush1.bf16.msra.mxu0 0
    %222 = vmatprep.subr.bf16.mxu0 0
    %223 = vmatpush1.bf16.msra.mxu0 0
    %224 = vmatprep.subr.bf16.mxu0 0
    %225 = vmatpush1.bf16.msra.mxu0 0
    %226 = vmatprep.subr.bf16.mxu0 0
    %227 = vmatpush1.bf16.msra.mxu0 %v214
    %228 = vmatprep.subr.bf16.mxu0 0
    %229 = vmatpush1.bf16.msra.mxu0 %v205
    %230 = vmatprep.subr.bf16.mxu0 0
    %231 = vmatpush1.bf16.msra.mxu0 %v204
    %232 = vmatprep.subr.bf16.mxu0 0
    %233 = vmatpush2.bf16.msra.mxu0 0
    %234 = vmatprep.subr.bf16.mxu0 0
    %235 = vmatpush2.bf16.msra.mxu0 0
    %236 = vmatprep.subr.bf16.mxu0 0
    %237 = vmatpush2.bf16.msra.mxu0 0
    %238 = vmatprep.subr.bf16.mxu0 0
    %239 = vmatpush2.bf16.msra.mxu0 0
    %240 = vmatprep.subr.bf16.mxu0 0
    %241 = vmatpush2.bf16.msra.mxu0 0
    %242 = vmatprep.subr.bf16.mxu0 0
    %243 = vmatpush2.bf16.msra.mxu0 0
    %244 = vmatprep.subr.bf16.mxu0 0
    %245 = vmatpush2.bf16.msra.mxu0 0
    %246 = vmatprep.subr.bf16.mxu0 0
    %247 = vmatpush2.bf16.msra.mxu0 0
    %248 = vmatprep.mubr.bf16.mxu0 0
    %249 = vmatmul.mubr.bf16.gmra.mxu0 %v210
    %v250 = vpop.f32.mrf.mxu0
    %v251 = vadd.f32 0.0, %v250
    %v252 = vpop.f32.mrf.mxu0
    %v253 = vpop.f32.mrf.mxu0
    %v254 = vpop.f32.mrf.mxu0
    %255 = vdwg.mxu0
    %v256 = vadd.f32 %v172, %v251
    %v257 = vxor.u32 %v256, 2147483648
    %v258 = vmul.f32 %v257, 1.442695
    %v259 = vpow.pop %v258
    %v260 = vadd.f32 %v259, 1.0
    %v261 = vrcp.pop %v260
    %v262 = vmul.f32 1.0, %v261
    %v263 = vtanh.pop %v256
    %v264 = vmul.f32 %v262, %v178
    %266 = vrot.lane.b32.xlu0 %v263, 64
    %v267 = vpop.permute.xlu0 %266
    %v269 = vmul.f32 %v262, %v267
    %271 = vrot.lane.b32.xlu0 %v269, 32
    %v272 = vpop.permute.xlu0 %271
    %v274 = vadd.f32 %v264, %v272
    %v275 = vtanh.pop %v274
    %277 = vrot.lane.b32.xlu0 %v275, 64
    %v278 = vpop.permute.xlu0 %277
    %v280 = vmul.f32 %v262, %v278
    %v281 = vpack.c.bf16 %v280, %v280
    %v282 = vld [vmem:[#allocation10] sm:$0xf]
    %v283 = vld [vmem:[#allocation10 + $0x4] sm:$0xf]
    %v284 = vld [vmem:[#allocation10 + $0x8] sm:$0xf]
    %v285 = vld [vmem:[#allocation10 + $0xc] sm:$0xf]
    %v286 = vld [vmem:[%s6] sm:$0x1]
    %v288 = vlaneseq
    %v289 = vshrl.u32 %v288, 7
    %v290 = vsub.s32 0, %v289
    %v291 = vrot.slane %v286, %v290
    %294 = vrot.lane.b32.xlu0 %v281, 32
    %v295 = vpop.permute.xlu0 %294
    %v300 = vunpack.c.l.b16 %v282
    %v301 = vunpack.c.l.b16 %v283
    %v302 = vunpack.c.l.b16 %v284
    %v303 = vunpack.c.l.b16 %v285
    %v304 = vpack.c.b16 %v301, %v300
    %v305 = vpack.c.b16 %v303, %v302
    %v309 = vsel %vm133, %v295, 0
    %311 = vmatprep.subr.bf16.mxu0 0
    %312 = vmatpush1.bf16.msra.mxu0 0
    %313 = vmatprep.subr.bf16.mxu0 0
    %314 = vmatpush1.bf16.msra.mxu0 0
    %315 = vmatprep.subr.bf16.mxu0 0
    %316 = vmatpush1.bf16.msra.mxu0 0
    %317 = vmatprep.subr.bf16.mxu0 0
    %318 = vmatpush1.bf16.msra.mxu0 0
    %319 = vmatprep.subr.bf16.mxu0 0
    %320 = vmatpush1.bf16.msra.mxu0 0
    %321 = vmatprep.subr.bf16.mxu0 0
    %322 = vmatpush1.bf16.msra.mxu0 0
    %323 = vmatprep.subr.bf16.mxu0 0
    %324 = vmatpush1.bf16.msra.mxu0 %v305
    %325 = vmatprep.subr.bf16.mxu0 0
    %326 = vmatpush1.bf16.msra.mxu0 %v304
    %327 = vmatprep.subr.bf16.mxu0 0
    %328 = vmatpush2.bf16.msra.mxu0 0
    %329 = vmatprep.subr.bf16.mxu0 0
    %330 = vmatpush2.bf16.msra.mxu0 0
    %331 = vmatprep.subr.bf16.mxu0 0
    %332 = vmatpush2.bf16.msra.mxu0 0
    %333 = vmatprep.subr.bf16.mxu0 0
    %334 = vmatpush2.bf16.msra.mxu0 0
    %335 = vmatprep.subr.bf16.mxu0 0
    %336 = vmatpush2.bf16.msra.mxu0 0
    %337 = vmatprep.subr.bf16.mxu0 0
    %338 = vmatpush2.bf16.msra.mxu0 0
    %339 = vmatprep.subr.bf16.mxu0 0
    %340 = vmatpush2.bf16.msra.mxu0 0
    %341 = vmatprep.subr.bf16.mxu0 0
    %342 = vmatpush2.bf16.msra.mxu0 0
    %343 = vmatprep.mubr.bf16.mxu0 0
    %344 = vmatmul.mubr.bf16.gmra.mxu0 %v309
    %v345 = vpop.f32.mrf.mxu0
    %v346 = vadd.f32 %v291, %v345
    %v347 = vpop.f32.mrf.mxu0
    %v348 = vpop.f32.mrf.mxu0
    %v349 = vpop.f32.mrf.mxu0
    %350 = vdwg.mxu0
    %v351 = vlaneseq
    %v352 = vand.u32 %v351, 127
    %vm353 = vcmp.ge.s32.totalorder %v352, 14
    %vm354 = vcmp.lt.s32.totalorder %v352, 54
    %vm355 = vmand %vm353, %vm354
    %vm356 = vcmp.ge.s32.totalorder %v352, 54
    %vm357 = vcmp.lt.s32.totalorder %v352, 70
    %vm358 = vmand %vm356, %vm357
    %v359 = vmul.f32 %v346, 1.442695
    %v360 = vpow.pop %v359
    %v361 = vtanh.pop %v346
    %v362 = vsel %vm358, 1, 0
    %vm363 = vcmp.eq.s32.totalorder %v362, 1
    %v364 = vsel %vm363, %v361, %v346
    %v365 = vsel %vm355, 1, 0
    %vm366 = vcmp.eq.s32.totalorder %v365, 1
    %v367 = vsel %vm366, %v360, %v364
    %vm368 = vcmask 31744
    %v369 = vsel %vm368, %v346, -inf
    %370 = vmax.xlane.f32.xlu0 %v369
    %v371 = vpop.xlane.xlu0 %370
    %v372 = vsub.f32 %v346, %v371
    %v373 = vmul.f32 %v372, 1.442695
    %v374 = vpow.pop %v373
    %v375 = vsel %vm368, %v374, 0.0
    %376 = vadd.xlane.f32.xlu0 %v375
    %v377 = vpop.xlane.xlu0 %376
    %v378 = vrcp.pop %v377
    %v379 = vmul.f32 %v374, %v378
    %vm380 = vcmask 64544
    %v381 = vsel %vm380, %v346, -inf
    %382 = vmax.xlane.f32.xlu0 %v381
    %v383 = vpop.xlane.xlu0 %382
    %v384 = vsub.f32 %v346, %v383
    %v385 = vmul.f32 %v384, 1.442695
    %v386 = vpow.pop %v385
    %388 = vrot.lane.b32.xlu0 %v386, 124
    %v389 = vpop.permute.xlu0 %388
    %v391 = vsel %vm368, %v389, 0.0
    %392 = vadd.xlane.f32.xlu0 %v391
    %v393 = vpop.xlane.xlu0 %392
    %v394 = vrcp.pop %v393
    %v395 = vmul.f32 %v386, %v394
    %vm396 = vcmask 89152
    %v397 = vsel %vm396, %v346, -inf
    %398 = vmax.xlane.f32.xlu0 %v397
    %v399 = vpop.xlane.xlu0 %398
    %v400 = vsub.f32 %v346, %v399
    %v401 = vmul.f32 %v400, 1.442695
    %v402 = vpow.pop %v401
    %404 = vrot.lane.b32.xlu0 %v402, 120
    %v405 = vpop.permute.xlu0 %404
    %vm407 = vcmask 23552
    %v408 = vsel %vm407, %v405, 0.0
    %409 = vadd.xlane.f32.xlu0 %v408
    %v410 = vpop.xlane.xlu0 %409
    %v411 = vrcp.pop %v410
    %v412 = vmul.f32 %v402, %v411
    %vm413 = vcmask 113752
    %v414 = vsel %vm413, %v346, -inf
    %415 = vmax.xlane.f32.xlu0 %v414
    %v416 = vpop.xlane.xlu0 %415
    %v417 = vsub.f32 %v346, %v416
    %v418 = vmul.f32 %v417, 1.442695
    %v419 = vpow.pop %v418
    %421 = vrot.lane.b32.xlu0 %v419, 117
    %v422 = vpop.permute.xlu0 %421
    %v424 = vsel %vm407, %v422, 0.0
    %425 = vadd.xlane.f32.xlu0 %v424
    %v426 = vpop.xlane.xlu0 %425
    %v427 = vrcp.pop %v426
    %v428 = vmul.f32 %v419, %v427
    %v429 = vsel %vm368, %v379, %v395
    %v430 = vsel %vm185, %v429, %v412
    %vm431 = vcmask 89088
    %v432 = vsel %vm431, %v430, %v428
    %vm433 = vcmask 113664
    %v434 = vsel %vm433, %v432, %v367
    %435 = vst [vmem:[#allocation11] sm:$0xff] %v434
    %437 = vrot.lane.b32.xlu0 %v280, 32
    %v438 = vpop.permute.xlu0 %437
    %v440 = vsel %vm133, %v438, %v274
    %vm441 = vcmask 523264
    %v442 = vsel %vm441, %v440, 0.0
    %443 = vst [vmem:[#allocation12] sm:$0xff] %v442
    // Predicated region
    $region50: #{tpu_custom_call.1} parent=1 // pred_check
      _
    $region51: #{tpu_custom_call.1} parent=1 // pred_check_branch
      %445 = sbr.rel (0) target = $region53
    $region52: #{tpu_custom_call.1} parent=1 // pred_region
      %s447 = ssub.s32 128, 128
      %448 = vsyncadd [#allocation4], %s447
      %s450 = sshll.u32 [#allocation11], 4
      %s451 = int_to_ptr.vmem [resolvable:$true] %s450
      %453 = dma.vmem_to_hbm [thread:$0]  %s451, 128, %s7, [#allocation4]
    $region53: #{tpu_custom_call.1} parent=1 // pred_fallthru
      _
    // Predicated region
    $region54: #{tpu_custom_call.1} parent=1 // pred_check
      _
    $region55: #{tpu_custom_call.1} parent=1 // pred_check_branch
      %455 = sbr.rel (0) target = $region57
    $region56: #{tpu_custom_call.1} parent=1 // pred_region
      %s457 = ssub.s32 128, 128
      %458 = vsyncadd [#allocation13], %s457
      %s460 = sshll.u32 [#allocation12], 4
      %s461 = int_to_ptr.vmem [resolvable:$true] %s460
      %463 = dma.vmem_to_hbm [thread:$0]  %s461, 128, %s8, [#allocation13]
    $region57: #{tpu_custom_call.1} parent=1 // pred_fallthru
      _
    // Predicated region
    $region58: #{tpu_custom_call.1} parent=1 // pred_check
      _
    $region59: #{tpu_custom_call.1} parent=1 // pred_check_branch
      %465 = sbr.rel (0) target = $region61
    $region60: #{tpu_custom_call.1} parent=1 // pred_region
      %466 = dma.done [#allocation4], 128
    $region61: #{tpu_custom_call.1} parent=1 // pred_fallthru
      _
    // Predicated region
    $region62: #{tpu_custom_call.1} parent=1 // pred_check
      _
    $region63: #{tpu_custom_call.1} parent=1 // pred_check_branch
      %468 = sbr.rel (0) target = $region65
    $region64: #{tpu_custom_call.1} parent=1 // pred_region
      %469 = dma.done [#allocation13], 128
    $region65: #{tpu_custom_call.1} parent=1 // pred_fallthru
      _
    %470 = vsyncpa [#allocation3], 1
    %471 = vsyncpa [#allocation6], 1
    %472 = vsyncpa [#allocation9], 1
    %473 = vsyncpa [#allocation4], 1
    %474 = vsyncpa [#allocation13], 1

</llo_original>
